<compile_context>
chip_gen: v7x
topology: tpu7x:2x2x1
jax: 0.10.0
libtpu: 0.0.40
codegen_flags: <defaults>
</compile_context>

<pallas_src>
import jax
import jax.numpy as jnp
from jax import lax
from jax.experimental import pallas as pl
from jax.experimental.pallas import tpu as pltpu

# ---- model hyper-params (small, consistent with the module's __init__) ----
BATCH = 2
SEQ = 8
HIDDEN = 32            # bert_model.config.hidden_size
NUM_FILTERS = 8
FILTER_SIZES = (2, 3, 4)
OUTPUT_SIZE = 4
VOCAB = 50

MAXFS = max(FILTER_SIZES)        # 4
V_PAD = 64                       # vocab padded so MAXFS * V_PAD == 256
K_FUSED = MAXFS * V_PAD          # 256: fused (embedding x conv-tap) contraction depth
PAD_F = 128                      # conv-feature lanes (3*8 = 24 real, rest 0)
PAD_O = 128                      # output lanes (4 real, rest 0)
NEG_BIG = -1e30                  # additive "-inf" for the time mask
SENTINEL = -(1 << 20)            # masked-token id: never matches any one-hot column
BIAS_COL = V_PAD - 1             # one-hot lane that is constantly 1 (carries conv biases)
ONE_COL = PAD_F - 1              # pooled lane that is constantly 1 (carries the fc bias)

# row layout of the packed constant slab (all blocks are 128 lanes wide)
FC_ROW0 = K_FUSED                # rows [256, 384): fc weight  (PAD_F, PAD_O)
TM_ROW0 = K_FUSED + PAD_F        # rows [384, 392): additive time mask (SEQ, PAD_F)
SLAB_ROWS = TM_ROW0 + SEQ        # 392


def fused_kernel(ids_ref, mask_ref, slab_ref, out_ref):
    """Masked one-hot embed + Conv1d(x3) + ReLU + max-over-time + Linear, fused."""
    B, S = ids_ref.shape
    BS = B * S

    # TODO(synk): the BERT encoder (self-attention stack) is approximated by a
    # masked embedding lookup; attention_mask only zeroes token embeddings here.
    ids = jnp.where(mask_ref[...] > 0, ids_ref[...], SENTINEL)          # (B, S) i32

    # One-hot of all MAXFS conv taps in a single (B, S, 256) boolean build.
    # Column k*V_PAD + v is 1 iff ids[b, t+k] == v; column BIAS_COL is always 1
    # (feeds the conv biases through the matmul). The only data movement along
    # time is a one-vreg integer roll of the ids -- the previous version's
    # sublane-crossing float tap slice+concat is eliminated entirely.
    col = lax.broadcasted_iota(jnp.int32, (B, S, K_FUSED), 2)
    hit = col == BIAS_COL
    for k in range(MAXFS):
        ids_k = ids if k == 0 else jnp.roll(ids, -k, axis=1)            # ids[b, (t+k) % S]
        # wrapped lanes (t >= S-k) only reach time rows the additive mask kills.
        hit = hit | (col == ids_k[:, :, None] + k * V_PAD)
    oh = hit.astype(jnp.float32).reshape(BS, K_FUSED)                   # (16, 256)

    # Single fused (embedding @ conv-taps) matmul: K = 256 exactly fills the
    # MXU contraction depth on v6e/v7x (two clean 128-deep passes on v5e).
    wcomb = slab_ref[0:K_FUSED, :]                                      # (256, 128)
    z = jnp.dot(oh, wcomb, preferred_element_type=jnp.float32)          # (16, 128)
    z = z.reshape(B, S, PAD_F)

    # Additive time mask (0 valid / -1e30 past each branch's valid-conv length),
    # max over time, then ReLU (post-max == pre-max: bias is time-constant and
    # already inside z via BIAS_COL; ReLU is monotone). Dropout(0.2) = identity.
    tmask = slab_ref[TM_ROW0:TM_ROW0 + S, :]                            # (8, 128)
    pooled = jnp.max(z + tmask[None, :, :], axis=1)                     # (B, 128)
    feat = jnp.maximum(pooled, 0.0)

    # Final Linear; the fc bias rides the constant-one pooled lane ONE_COL.
    fcw = slab_ref[FC_ROW0:FC_ROW0 + PAD_F, :]                          # (128, 128)
    out_ref[...] = jnp.dot(feat, fcw, preferred_element_type=jnp.float32)   # lane-dense (B, 128)


def textcnn_forward(input_ids, attention_mask, slab):
    """input_ids/attention_mask: (B, S) int32. Returns logits (B, OUTPUT_SIZE)."""
    B = input_ids.shape[0]
    vmem = pl.BlockSpec(memory_space=pltpu.MemorySpace.VMEM)
    out = pl.pallas_call(
        fused_kernel,
        out_shape=jax.ShapeDtypeStruct((B, PAD_O), jnp.float32),
        in_specs=[vmem, vmem, vmem],
        out_specs=vmem,
    )(input_ids, attention_mask, slab)
    return out[:, :OUTPUT_SIZE]


def init_params(key):
    """Deterministic synthetic parameters in PyTorch layouts."""
    keys = jax.random.split(key, 1 + 2 * len(FILTER_SIZES) + 2)
    i = 0
    embed_tbl = jax.random.normal(keys[i], (VOCAB, HIDDEN), jnp.float32) * 0.1
    i += 1
    conv_ws, conv_bs = [], []
    for fs in FILTER_SIZES:
        # PyTorch Conv1d weight layout: (F, H, fs)
        w = jax.random.normal(keys[i], (NUM_FILTERS, HIDDEN, fs), jnp.float32) * 0.05
        i += 1
        b = jax.random.normal(keys[i], (NUM_FILTERS,), jnp.float32) * 0.01
        i += 1
        conv_ws.append(w)
        conv_bs.append(b)
    # PyTorch Linear weight layout: (O, F * n_filter_sizes)
    fc_w = jax.random.normal(
        keys[i], (OUTPUT_SIZE, NUM_FILTERS * len(FILTER_SIZES)), jnp.float32) * 0.05
    i += 1
    fc_b = jax.random.normal(keys[i], (OUTPUT_SIZE,), jnp.float32) * 0.01
    return embed_tbl, conv_ws, conv_bs, fc_w, fc_b


def pack_params(embed_tbl, conv_ws, conv_bs, fc_w, fc_b):
    """Pack PyTorch-layout weights into ONE (392, 128) f32 slab (host side, once)."""
    n_feat = len(FILTER_SIZES) * NUM_FILTERS
    # invariants the wrap-around / bias-lane tricks rely on
    assert VOCAB < V_PAD, "BIAS_COL must be outside the real vocab range"
    assert n_feat < ONE_COL, "ONE_COL must be a padding feature lane"

    tbl_pad = jnp.zeros((V_PAD, HIDDEN), jnp.float32).at[:VOCAB, :].set(embed_tbl)

    wcomb = jnp.zeros((K_FUSED, PAD_F), jnp.float32)
    tmask = jnp.zeros((SEQ, PAD_F), jnp.float32)
    for i, (w, b, fs) in enumerate(zip(conv_ws, conv_bs, FILTER_SIZES)):
        c0 = i * NUM_FILTERS
        for k in range(fs):
            # embedding folded into tap-k filters: (V_PAD, H) @ (H, F) -> (V_PAD, F)
            blk = tbl_pad @ w[:, :, k].T
            wcomb = wcomb.at[k * V_PAD:(k + 1) * V_PAD,
                             c0:c0 + NUM_FILTERS].set(blk)
        # conv bias rides the always-one one-hot lane (tap 0, v = BIAS_COL)
        wcomb = wcomb.at[BIAS_COL, c0:c0 + NUM_FILTERS].set(b)
        # invalid "valid-conv" time positions t >= S - fs + 1 get -1e30
        tmask = tmask.at[SEQ - fs + 1:, c0:c0 + NUM_FILTERS].set(NEG_BIG)
    # constant-one pooled feature (lane ONE_COL) that will carry the fc bias
    wcomb = wcomb.at[BIAS_COL, ONE_COL].set(1.0)

    fcw = jnp.zeros((PAD_F, PAD_O), jnp.float32)
    fcw = fcw.at[:n_feat, :OUTPUT_SIZE].set(fc_w.T)        # (O, 3F) -> (3F, O)
    fcw = fcw.at[ONE_COL, :OUTPUT_SIZE].set(fc_b)          # fc bias via constant-1 lane

    slab = jnp.concatenate([wcomb, fcw, tmask], axis=0)    # (392, 128)
    assert slab.shape == (SLAB_ROWS, PAD_F)
    return slab


def reference_forward(input_ids, attention_mask, embed_tbl, conv_ws, conv_bs, fc_w, fc_b):
    """Pure-JAX reference of the SAME stand-in semantics (numerics check only)."""
    emb = embed_tbl[input_ids] * attention_mask[..., None].astype(jnp.float32)  # (B,S,H)
    pooled = []
    for w, b, fs in zip(conv_ws, conv_bs, FILTER_SIZES):
        conv_t = [jnp.einsum('bkh,fhk->bf', emb[:, t:t + fs, :], w) + b
                  for t in range(SEQ - fs + 1)]
        conv = jnp.stack(conv_t, axis=-1)                    # (B, F, S-fs+1)
        pooled.append(jnp.max(jax.nn.relu(conv), axis=-1))   # (B, F)
    feat = jnp.concatenate(pooled, axis=1)                   # (B, 3F); dropout = identity
    return feat @ fc_w.T + fc_b


if __name__ == "__main__":
    key = jax.random.PRNGKey(0)
    k_param, k_ids = jax.random.split(key, 2)

    embed_tbl, conv_ws, conv_bs, fc_w, fc_b = init_params(k_param)
    slab = pack_params(embed_tbl, conv_ws, conv_bs, fc_w, fc_b)

    input_ids = jax.random.randint(k_ids, (BATCH, SEQ), 0, VOCAB, dtype=jnp.int32)
    attention_mask = jnp.ones((BATCH, SEQ), dtype=jnp.int32)
    attention_mask = attention_mask.at[1, SEQ - 2:].set(0)   # exercise the mask-fold path

    logits = jax.block_until_ready(textcnn_forward(input_ids, attention_mask, slab))
    assert logits.shape == (BATCH, OUTPUT_SIZE)

    ref = reference_forward(input_ids, attention_mask,
                            embed_tbl, conv_ws, conv_bs, fc_w, fc_b)
    err = float(jnp.max(jnp.abs(logits - ref)))
    assert err < 5e-3, f"kernel vs reference mismatch: max abs err = {err}"
    print("KERNEL_OK")
</pallas_src>

<mosaic_0001>
module attributes {stable_mosaic.version = 11 : i64} {
  func.func @fused_kernel(%arg0: memref<2x8xi32, #tpu.memory_space<vmem>>, %arg1: memref<2x8xi32, #tpu.memory_space<vmem>>, %arg2: memref<392x128xf32, #tpu.memory_space<vmem>>, %arg3: memref<2x128xf32, #tpu.memory_space<vmem>>) attributes {dimension_semantics = [], scalar_prefetch = 0 : i64, scratch_operands = 0 : i64, tpu.core_type = #tpu.core_type<tc>} {
    %c0 = arith.constant 0 : index
    %c0_0 = arith.constant 0 : index
    %0 = vector.load %arg1[%c0, %c0_0] : memref<2x8xi32, #tpu.memory_space<vmem>>, vector<2x8xi32>
    %c0_i32 = arith.constant 0 : i32
    %1 = vector.broadcast %c0_i32 : i32 to vector<2x8xi32>
    %2 = arith.cmpi sgt, %0, %1 : vector<2x8xi32>
    %c0_1 = arith.constant 0 : index
    %c0_2 = arith.constant 0 : index
    %3 = vector.load %arg0[%c0_1, %c0_2] : memref<2x8xi32, #tpu.memory_space<vmem>>, vector<2x8xi32>
    %c-1048576_i32 = arith.constant -1048576 : i32
    %4 = vector.broadcast %c-1048576_i32 : i32 to vector<2x8xi32>
    %5 = arith.select %2, %3, %4 : vector<2x8xi1>, vector<2x8xi32>
    %6 = tpu.iota {dimensions = array<i32: 2>} : vector<2x8x256xi32>
    %c63_i32 = arith.constant 63 : i32
    %7 = vector.broadcast %c63_i32 : i32 to vector<2x8x256xi32>
    %8 = arith.cmpi eq, %6, %7 : vector<2x8x256xi32>
    %9 = vector.shape_cast %5 : vector<2x8xi32> to vector<2x8x1xi32>
    %c0_i32_3 = arith.constant 0 : i32
    %10 = vector.broadcast %c0_i32_3 : i32 to vector<2x8x1xi32>
    %11 = arith.addi %9, %10 : vector<2x8x1xi32>
    %12 = vector.broadcast %11 : vector<2x8x1xi32> to vector<2x8x256xi32>
    %13 = arith.cmpi eq, %6, %12 : vector<2x8x256xi32>
    %14 = arith.ori %8, %13 : vector<2x8x256xi1>
    %15 = vector.extract_strided_slice %5 {offsets = [0, 1], sizes = [2, 7], strides = [1, 1]} : vector<2x8xi32> to vector<2x7xi32>
    %16 = vector.extract_strided_slice %5 {offsets = [0, 0], sizes = [2, 1], strides = [1, 1]} : vector<2x8xi32> to vector<2x1xi32>
    %17 = tpu.concatenate %15, %16 in 1 : vector<2x7xi32>, vector<2x1xi32> -> vector<2x8xi32>
    %18 = vector.shape_cast %17 : vector<2x8xi32> to vector<2x8x1xi32>
    %c64_i32 = arith.constant 64 : i32
    %19 = vector.broadcast %c64_i32 : i32 to vector<2x8x1xi32>
    %20 = arith.addi %18, %19 : vector<2x8x1xi32>
    %21 = vector.broadcast %20 : vector<2x8x1xi32> to vector<2x8x256xi32>
    %22 = arith.cmpi eq, %6, %21 : vector<2x8x256xi32>
    %23 = arith.ori %14, %22 : vector<2x8x256xi1>
    %24 = vector.extract_strided_slice %5 {offsets = [0, 2], sizes = [2, 6], strides = [1, 1]} : vector<2x8xi32> to vector<2x6xi32>
    %25 = vector.extract_strided_slice %5 {offsets = [0, 0], sizes = [2, 2], strides = [1, 1]} : vector<2x8xi32> to vector<2x2xi32>
    %26 = tpu.concatenate %24, %25 in 1 : vector<2x6xi32>, vector<2x2xi32> -> vector<2x8xi32>
    %27 = vector.shape_cast %26 : vector<2x8xi32> to vector<2x8x1xi32>
    %c128_i32 = arith.constant 128 : i32
    %28 = vector.broadcast %c128_i32 : i32 to vector<2x8x1xi32>
    %29 = arith.addi %27, %28 : vector<2x8x1xi32>
    %30 = vector.broadcast %29 : vector<2x8x1xi32> to vector<2x8x256xi32>
    %31 = arith.cmpi eq, %6, %30 : vector<2x8x256xi32>
    %32 = arith.ori %23, %31 : vector<2x8x256xi1>
    %33 = vector.extract_strided_slice %5 {offsets = [0, 3], sizes = [2, 5], strides = [1, 1]} : vector<2x8xi32> to vector<2x5xi32>
    %34 = vector.extract_strided_slice %5 {offsets = [0, 0], sizes = [2, 3], strides = [1, 1]} : vector<2x8xi32> to vector<2x3xi32>
    %35 = tpu.concatenate %33, %34 in 1 : vector<2x5xi32>, vector<2x3xi32> -> vector<2x8xi32>
    %36 = vector.shape_cast %35 : vector<2x8xi32> to vector<2x8x1xi32>
    %c192_i32 = arith.constant 192 : i32
    %37 = vector.broadcast %c192_i32 : i32 to vector<2x8x1xi32>
    %38 = arith.addi %36, %37 : vector<2x8x1xi32>
    %39 = vector.broadcast %38 : vector<2x8x1xi32> to vector<2x8x256xi32>
    %40 = arith.cmpi eq, %6, %39 : vector<2x8x256xi32>
    %41 = arith.ori %32, %40 : vector<2x8x256xi1>
    %42 = arith.extui %41 : vector<2x8x256xi1> to vector<2x8x256xi32>
    %43 = arith.sitofp %42 : vector<2x8x256xi32> to vector<2x8x256xf32>
    %44 = vector.shape_cast %43 : vector<2x8x256xf32> to vector<16x256xf32>
    %c0_4 = arith.constant 0 : index
    %c0_5 = arith.constant 0 : index
    %45 = vector.load %arg2[%c0_4, %c0_5] : memref<392x128xf32, #tpu.memory_space<vmem>>, vector<256x128xf32>
    %cst = arith.constant dense<0.000000e+00> : vector<16x128xf32>
    %46 = tpu.matmul %44, %45, %cst {dimension_numbers = #tpu.dot_dimension_numbers<[1], [0], [0], [1], [0, 0, 1, 1], [], []>} : vector<16x256xf32>, vector<256x128xf32>, vector<16x128xf32> -> vector<16x128xf32>
    %47 = vector.shape_cast %46 : vector<16x128xf32> to vector<2x8x128xf32>
    %c384 = arith.constant 384 : index
    %c0_6 = arith.constant 0 : index
    %48 = vector.load %arg2[%c384, %c0_6] : memref<392x128xf32, #tpu.memory_space<vmem>>, vector<8x128xf32>
    %49 = vector.shape_cast %48 : vector<8x128xf32> to vector<1x8x128xf32>
    %50 = vector.broadcast %49 : vector<1x8x128xf32> to vector<2x8x128xf32>
    %51 = arith.addf %47, %50 : vector<2x8x128xf32>
    %cst_7 = arith.constant dense<0xFF800000> : vector<2x128xf32>
    %52 = vector.multi_reduction <maximumf>, %51, %cst_7 [1] : vector<2x8x128xf32> to vector<2x128xf32>
    %cst_8 = arith.constant 0.000000e+00 : f32
    %53 = vector.broadcast %cst_8 : f32 to vector<2x128xf32>
    %54 = arith.maximumf %52, %53 : vector<2x128xf32>
    %c256 = arith.constant 256 : index
    %c0_9 = arith.constant 0 : index
    %55 = vector.load %arg2[%c256, %c0_9] : memref<392x128xf32, #tpu.memory_space<vmem>>, vector<128x128xf32>
    %cst_10 = arith.constant dense<0.000000e+00> : vector<2x128xf32>
    %56 = tpu.matmul %54, %55, %cst_10 {dimension_numbers = #tpu.dot_dimension_numbers<[1], [0], [0], [1], [0, 0, 1, 1], [], []>} : vector<2x128xf32>, vector<128x128xf32>, vector<2x128xf32> -> vector<2x128xf32>
    %c0_11 = arith.constant 0 : index
    %c0_12 = arith.constant 0 : index
    %57 = vector.load %arg3[%c0_11, %c0_12] : memref<2x128xf32, #tpu.memory_space<vmem>>, vector<2x128xf32>
    tpu.vector_store %arg3[%c0_11, %c0_12], %56 {strides = array<i32>} : memref<2x128xf32, #tpu.memory_space<vmem>>, vector<2x128xf32>,
    return
  }
}

</mosaic_0001>

<llo_original>
// kernel: tpu_custom_call.1
$region0: #{tpu_custom_call.1}
  #allocation0 [shape = 'u32[]', space=smem, size = 0x4, offset = 0x4, fixed_abs, tag = 'smem constant byte address 0x4 - core index']
  #allocation1 [shape = 'u32[144,128]{1,0:T(1,128)}', space=vmem, size = 0x12000, scoped, tag = 'internal scratch']
  %s0 = inlined_call_operand.hbm [shape: s32[2,8], index: 0, kind: input, shape index: {}]
  %s1 = inlined_call_operand.vmem [shape: s32[2,8], index: 1, kind: input, shape index: {}]
  %s2 = inlined_call_operand.hbm [shape: f32[392,128], index: 2, kind: input, shape index: {}]
  %s3 = inlined_call_operand.hbm [shape: f32[2,128], index: 3, kind: output, shape index: {}]
  %s4 = sld [smem:[#allocation0]]
  $region30: #{tpu_custom_call.1} parent=0
    _
  %s6 = ssub.s32 1, %s4
  %s7 = scalar_select 0, %s6, %s4
  $region1: #{tpu_custom_call.1} parent=0
    #allocation2 [shape = 'u8[1024]{0}', space=vmem, size = 0x400, scoped, tag = 'input window, operand 0, single buffered']
    #allocation3 [shape = 's32[1]{0}', space=sflag, size = 0x4, scoped, tag = 'scoped memory for tpu_custom_call.1']
    #allocation4 [shape = 's32[1]{0}', space=sflag, size = 0x4, scoped, tag = 'scoped memory for tpu_custom_call.1']
    #allocation5 [shape = 'u8[200704]{0}', space=vmem, size = 0x31000, scoped, tag = 'input window, operand 2, single buffered']
    #allocation6 [shape = 's32[1]{0}', space=sflag, size = 0x4, scoped, tag = 'scoped memory for tpu_custom_call.1']
    #allocation7 [shape = 'u8[1024]{0}', space=vmem, size = 0x400, scoped, tag = 'output window, operand 0, single buffered']
    %8 = vsyncpa [#allocation3], 0
    %9 = vsyncpa [#allocation6], 0
    %10 = vsyncpa [#allocation4], 0
    // Predicated region
    $region2: #{tpu_custom_call.1} parent=1 // pred_check
      _
    $region3: #{tpu_custom_call.1} parent=1 // pred_check_branch
      %12 = sbr.rel (0) target = $region5
    $region4: #{tpu_custom_call.1} parent=1 // pred_region
      %s14 = ssub.s32 32, 32
      %15 = vsyncadd [#allocation3], %s14
      %s17 = sshll.u32 [#allocation2], 4
      %s18 = int_to_ptr.vmem [resolvable:$true] %s17
      %20 = dma.hbm_to_vmem [thread:$0]  %s0, 32, %s18, [#allocation3]
    $region5: #{tpu_custom_call.1} parent=1 // pred_fallthru
      _
    // Predicated region
    $region6: #{tpu_custom_call.1} parent=1 // pred_check
      _
    $region7: #{tpu_custom_call.1} parent=1 // pred_check_branch
      %22 = sbr.rel (0) target = $region9
    $region8: #{tpu_custom_call.1} parent=1 // pred_region
      _
    $region9: #{tpu_custom_call.1} parent=1 // pred_fallthru
      _
    // Predicated region
    $region10: #{tpu_custom_call.1} parent=1 // pred_check
      _
    $region11: #{tpu_custom_call.1} parent=1 // pred_check_branch
      %24 = sbr.rel (0) target = $region13
    $region12: #{tpu_custom_call.1} parent=1 // pred_region
      %s26 = ssub.s32 6272, 6272
      %27 = vsyncadd [#allocation6], %s26
      %s28 = sshll.u32 [#allocation5], 4
      %s29 = int_to_ptr.vmem [resolvable:$true] %s28
      %34 = dma.hbm_to_vmem [thread:$0]  %s2, 6272, %s29, [#allocation6], 128, 128, 8
    $region13: #{tpu_custom_call.1} parent=1 // pred_fallthru
      _
    // Predicated region
    $region14: #{tpu_custom_call.1} parent=1 // pred_check
      _
    $region15: #{tpu_custom_call.1} parent=1 // pred_check_branch
      %36 = sbr.rel (0) target = $region17
    $region16: #{tpu_custom_call.1} parent=1 // pred_region
      %37 = dma.done [#allocation3], 32
    $region17: #{tpu_custom_call.1} parent=1 // pred_fallthru
      _
    // Predicated region
    $region18: #{tpu_custom_call.1} parent=1 // pred_check
      _
    $region19: #{tpu_custom_call.1} parent=1 // pred_check_branch
      %39 = sbr.rel (0) target = $region21
    $region20: #{tpu_custom_call.1} parent=1 // pred_region
      %40 = dma.done [#allocation6], 6272
    $region21: #{tpu_custom_call.1} parent=1 // pred_fallthru
      _
    %v41 = vld [vmem:[%s1] sm:$0x3]
    %vm42 = vcmp.gt.s32.totalorder %v41, 0
    %v43 = vld [vmem:[#allocation2] sm:$0x3]
    %v44 = vsel %vm42, %v43, 4293918720
    %v45 = vlaneseq
    %v46 = vand.u32 %v45, 127
    %v47 = vadd.s32 %v46, 128
    %vm48 = vcmp.eq.s32.totalorder %v46, 63
    %vm49 = vcmp.eq.s32.totalorder %v47, 63
    %v50 = vlaneseq
    %v51 = vshrl.u32 %v50, 7
    %v52 = vsub.s32 0, %v51
    %v53 = vrot.slane %v44, %v52
    %55 = vbcast.lane.b32.xlu0 %v53, 256
    %v56 = vpop.permute.xlu0 %55
    %v57 = vlaneseq
    %v58 = vshrl.u32 %v57, 7
    %v59 = vsub.s32 1, %v58
    %v60 = vrot.slane %v44, %v59
    %62 = vbcast.lane.b32.xlu0 %v60, 256
    %v63 = vpop.permute.xlu0 %62
    %vm64 = vcmp.eq.s32.totalorder %v46, %v56
    %vm65 = vcmp.eq.s32.totalorder %v47, %v56
    %vm66 = vcmp.eq.s32.totalorder %v46, %v63
    %vm67 = vcmp.eq.s32.totalorder %v47, %v63
    %vm68 = vmor %vm48, %vm64
    %vm69 = vmor %vm49, %vm65
    %vm70 = vmor %vm48, %vm66
    %vm71 = vmor %vm49, %vm67
    %72 = vrot.lane.b32.xlu0 %v44, 127
    %v73 = vpop.permute.xlu0 %72
    %74 = vrot.lane.b32.xlu0 %v44, 7
    %v75 = vpop.permute.xlu0 %74
    %vm76 = vcmask 56320
    %v77 = vsel %vm76, %v73, %v75
    %v78 = vlaneseq
    %v79 = vshrl.u32 %v78, 7
    %v80 = vsub.s32 0, %v79
    %v81 = vrot.slane %v77, %v80
    %83 = vbcast.lane.b32.xlu0 %v81, 256
    %v84 = vpop.permute.xlu0 %83
    %v85 = vlaneseq
    %v86 = vshrl.u32 %v85, 7
    %v87 = vsub.s32 1, %v86
    %v88 = vrot.slane %v77, %v87
    %90 = vbcast.lane.b32.xlu0 %v88, 256
    %v91 = vpop.permute.xlu0 %90
    %v92 = vadd.s32 %v84, 64
    %v93 = vadd.s32 %v91, 64
    %vm94 = vcmp.eq.s32.totalorder %v46, %v92
    %vm95 = vcmp.eq.s32.totalorder %v47, %v92
    %vm96 = vcmp.eq.s32.totalorder %v46, %v93
    %vm97 = vcmp.eq.s32.totalorder %v47, %v93
    %vm98 = vmor %vm68, %vm94
    %vm99 = vmor %vm69, %vm95
    %vm100 = vmor %vm70, %vm96
    %vm101 = vmor %vm71, %vm97
    %102 = vrot.lane.b32.xlu0 %v44, 126
    %v103 = vpop.permute.xlu0 %102
    %104 = vrot.lane.b32.xlu0 %v44, 6
    %v105 = vpop.permute.xlu0 %104
    %vm106 = vcmask 48128
    %v107 = vsel %vm106, %v103, %v105
    %v108 = vlaneseq
    %v109 = vshrl.u32 %v108, 7
    %v110 = vsub.s32 0, %v109
    %v111 = vrot.slane %v107, %v110
    %113 = vbcast.lane.b32.xlu0 %v111, 256
    %v114 = vpop.permute.xlu0 %113
    %v115 = vlaneseq
    %v116 = vshrl.u32 %v115, 7
    %v117 = vsub.s32 1, %v116
    %v118 = vrot.slane %v107, %v117
    %120 = vbcast.lane.b32.xlu0 %v118, 256
    %v121 = vpop.permute.xlu0 %120
    %v122 = vadd.s32 %v114, 128
    %v123 = vadd.s32 %v121, 128
    %vm124 = vcmp.eq.s32.totalorder %v46, %v122
    %vm125 = vcmp.eq.s32.totalorder %v47, %v122
    %vm126 = vcmp.eq.s32.totalorder %v46, %v123
    %vm127 = vcmp.eq.s32.totalorder %v47, %v123
    %vm128 = vmor %vm98, %vm124
    %vm129 = vmor %vm99, %vm125
    %vm130 = vmor %vm100, %vm126
    %vm131 = vmor %vm101, %vm127
    %132 = vrot.lane.b32.xlu0 %v44, 125
    %v133 = vpop.permute.xlu0 %132
    %134 = vrot.lane.b32.xlu0 %v44, 5
    %v135 = vpop.permute.xlu0 %134
    %vm136 = vcmask 39936
    %v137 = vsel %vm136, %v133, %v135
    %v138 = vlaneseq
    %v139 = vshrl.u32 %v138, 7
    %v140 = vsub.s32 0, %v139
    %v141 = vrot.slane %v137, %v140
    %143 = vbcast.lane.b32.xlu0 %v141, 256
    %v144 = vpop.permute.xlu0 %143
    %v145 = vlaneseq
    %v146 = vshrl.u32 %v145, 7
    %v147 = vsub.s32 1, %v146
    %v148 = vrot.slane %v137, %v147
    %150 = vbcast.lane.b32.xlu0 %v148, 256
    %v151 = vpop.permute.xlu0 %150
    %v152 = vadd.s32 %v144, 192
    %v153 = vadd.s32 %v151, 192
    %vm154 = vcmp.eq.s32.totalorder %v46, %v152
    %vm155 = vcmp.eq.s32.totalorder %v47, %v152
    %vm156 = vcmp.eq.s32.totalorder %v46, %v153
    %vm157 = vcmp.eq.s32.totalorder %v47, %v153
    %vm158 = vmor %vm128, %vm154
    %vm159 = vmor %vm129, %vm155
    %vm160 = vmor %vm130, %vm156
    %vm161 = vmor %vm131, %vm157
    %v162 = vsel %vm158, 1, 0
    %v163 = vsel %vm159, 1, 0
    %v164 = vsel %vm160, 1, 0
    %v165 = vsel %vm161, 1, 0
    %v166 = vcvt.s32.f32 %v162
    %v167 = vcvt.s32.f32 %v163
    %v168 = vcvt.s32.f32 %v164
    %v169 = vcvt.s32.f32 %v165
    %v170 = vld [vmem:[#allocation5] sm:$0xff]
    %v171 = vld [vmem:[#allocation5 + $0x8] sm:$0xff]
    %v172 = vld [vmem:[#allocation5 + $0x10] sm:$0xff]
    %v173 = vld [vmem:[#allocation5 + $0x18] sm:$0xff]
    %v174 = vld [vmem:[#allocation5 + $0x20] sm:$0xff]
    %v175 = vld [vmem:[#allocation5 + $0x28] sm:$0xff]
    %v176 = vld [vmem:[#allocation5 + $0x30] sm:$0xff]
    %v177 = vld [vmem:[#allocation5 + $0x38] sm:$0xff]
    %v178 = vld [vmem:[#allocation5 + $0x40] sm:$0xff]
    %v179 = vld [vmem:[#allocation5 + $0x48] sm:$0xff]
    %v180 = vld [vmem:[#allocation5 + $0x50] sm:$0xff]
    %v181 = vld [vmem:[#allocation5 + $0x58] sm:$0xff]
    %v182 = vld [vmem:[#allocation5 + $0x60] sm:$0xff]
    %v183 = vld [vmem:[#allocation5 + $0x68] sm:$0xff]
    %v184 = vld [vmem:[#allocation5 + $0x70] sm:$0xff]
    %v185 = vld [vmem:[#allocation5 + $0x78] sm:$0xff]
    %v186 = vld [vmem:[#allocation5 + $0x80] sm:$0xff]
    %v187 = vld [vmem:[#allocation5 + $0x88] sm:$0xff]
    %v188 = vld [vmem:[#allocation5 + $0x90] sm:$0xff]
    %v189 = vld [vmem:[#allocation5 + $0x98] sm:$0xff]
    %v190 = vld [vmem:[#allocation5 + $0xa0] sm:$0xff]
    %v191 = vld [vmem:[#allocation5 + $0xa8] sm:$0xff]
    %v192 = vld [vmem:[#allocation5 + $0xb0] sm:$0xff]
    %v193 = vld [vmem:[#allocation5 + $0xb8] sm:$0xff]
    %v194 = vld [vmem:[#allocation5 + $0xc0] sm:$0xff]
    %v195 = vld [vmem:[#allocation5 + $0xc8] sm:$0xff]
    %v196 = vld [vmem:[#allocation5 + $0xd0] sm:$0xff]
    %v197 = vld [vmem:[#allocation5 + $0xd8] sm:$0xff]
    %v198 = vld [vmem:[#allocation5 + $0xe0] sm:$0xff]
    %v199 = vld [vmem:[#allocation5 + $0xe8] sm:$0xff]
    %v200 = vld [vmem:[#allocation5 + $0xf0] sm:$0xff]
    %v201 = vld [vmem:[#allocation5 + $0xf8] sm:$0xff]
    %202 = vmatprep.subr.mxu0 0.0
    %203 = vmatpush1.msra.mxu0 %v170
    %204 = vmatprep.subr.mxu0 0.0
    %205 = vmatpush1.msra.mxu0 %v171
    %206 = vmatprep.subr.mxu0 0.0
    %207 = vmatpush1.msra.mxu0 %v172
    %208 = vmatprep.subr.mxu0 0.0
    %209 = vmatpush1.msra.mxu0 %v173
    %210 = vmatprep.subr.mxu0 0.0
    %211 = vmatpush1.msra.mxu0 %v174
    %212 = vmatprep.subr.mxu0 0.0
    %213 = vmatpush1.msra.mxu0 %v175
    %214 = vmatprep.subr.mxu0 0.0
    %215 = vmatpush1.msra.mxu0 %v176
    %216 = vmatprep.subr.mxu0 0.0
    %217 = vmatpush1.msra.mxu0 %v177
    %218 = vmatprep.subr.mxu0 0.0
    %219 = vmatpush1.msra.mxu0 %v178
    %220 = vmatprep.subr.mxu0 0.0
    %221 = vmatpush1.msra.mxu0 %v179
    %222 = vmatprep.subr.mxu0 0.0
    %223 = vmatpush1.msra.mxu0 %v180
    %224 = vmatprep.subr.mxu0 0.0
    %225 = vmatpush1.msra.mxu0 %v181
    %226 = vmatprep.subr.mxu0 0.0
    %227 = vmatpush1.msra.mxu0 %v182
    %228 = vmatprep.subr.mxu0 0.0
    %229 = vmatpush1.msra.mxu0 %v183
    %230 = vmatprep.subr.mxu0 0.0
    %231 = vmatpush1.msra.mxu0 %v184
    %232 = vmatprep.subr.mxu0 0.0
    %233 = vmatpush1.msra.mxu0 %v185
    %234 = vmatprep.subr.mxu0 0.0
    %235 = vmatpush1.msra.mxu0 %v186
    %236 = vmatprep.subr.mxu0 0.0
    %237 = vmatpush1.msra.mxu0 %v187
    %238 = vmatprep.subr.mxu0 0.0
    %239 = vmatpush1.msra.mxu0 %v188
    %240 = vmatprep.subr.mxu0 0.0
    %241 = vmatpush1.msra.mxu0 %v189
    %242 = vmatprep.subr.mxu0 0.0
    %243 = vmatpush1.msra.mxu0 %v190
    %244 = vmatprep.subr.mxu0 0.0
    %245 = vmatpush1.msra.mxu0 %v191
    %246 = vmatprep.subr.mxu0 0.0
    %247 = vmatpush1.msra.mxu0 %v192
    %248 = vmatprep.subr.mxu0 0.0
    %249 = vmatpush1.msra.mxu0 %v193
    %250 = vmatprep.subr.mxu0 0.0
    %251 = vmatpush1.msra.mxu0 %v194
    %252 = vmatprep.subr.mxu0 0.0
    %253 = vmatpush1.msra.mxu0 %v195
    %254 = vmatprep.subr.mxu0 0.0
    %255 = vmatpush1.msra.mxu0 %v196
    %256 = vmatprep.subr.mxu0 0.0
    %257 = vmatpush1.msra.mxu0 %v197
    %258 = vmatprep.subr.mxu0 0.0
    %259 = vmatpush1.msra.mxu0 %v198
    %260 = vmatprep.subr.mxu0 0.0
    %261 = vmatpush1.msra.mxu0 %v199
    %262 = vmatprep.subr.mxu0 0.0
    %263 = vmatpush1.msra.mxu0 %v200
    %264 = vmatprep.subr.mxu0 0.0
    %265 = vmatpush1.msra.mxu0 %v201
    %266 = vmatprep.mubr.f32.mxu0 %v167
    %267 = vmatmul.mubr.f32.gmra.mrb[0].mxu0 %v166
    %v268 = vpop.f32.mrb[0].mxu0
    %v269 = vadd.f32 0.0, %v268
    %v270 = vpop.f32.mrb[0].mxu0
    %271 = vmatprep.mubr.f32.mxu0 %v169
    %272 = vmatmul.mubr.f32.gmra.mrb[0].mxu0 %v168
    %v273 = vpop.f32.mrb[0].mxu0
    %v274 = vadd.f32 0.0, %v273
    %v275 = vpop.f32.mrb[0].mxu0
    %276 = vdwg.mxu0
    %v277 = vld [vmem:[#allocation5 + $0x180] sm:$0xff]
    %v278 = vadd.f32 %v269, %v277
    %v279 = vadd.f32 %v274, %v277
    %v280 = vrot.slane %v278, 4
    %v281 = vmax.f32 %v278, %v280
    %v282 = vrot.slane %v281, 2
    %v283 = vmax.f32 %v281, %v282
    %v284 = vrot.slane %v283, 1
    %v285 = vmax.f32 %v283, %v284
    %v286 = vrot.slane %v279, 4
    %v287 = vmax.f32 %v279, %v286
    %v288 = vrot.slane %v287, 2
    %v289 = vmax.f32 %v287, %v288
    %v290 = vrot.slane %v289, 1
    %v291 = vmax.f32 %v289, %v290
    %v292 = vmax.f32 %v285, 0.0
    %v293 = vmax.f32 %v291, 0.0
    %v294 = vld [vmem:[#allocation5 + $0x100] sm:$0xff]
    %v295 = vld [vmem:[#allocation5 + $0x108] sm:$0xff]
    %v296 = vld [vmem:[#allocation5 + $0x110] sm:$0xff]
    %v297 = vld [vmem:[#allocation5 + $0x118] sm:$0xff]
    %v298 = vld [vmem:[#allocation5 + $0x120] sm:$0xff]
    %v299 = vld [vmem:[#allocation5 + $0x128] sm:$0xff]
    %v300 = vld [vmem:[#allocation5 + $0x130] sm:$0xff]
    %v301 = vld [vmem:[#allocation5 + $0x138] sm:$0xff]
    %v302 = vld [vmem:[#allocation5 + $0x140] sm:$0xff]
    %v303 = vld [vmem:[#allocation5 + $0x148] sm:$0xff]
    %v304 = vld [vmem:[#allocation5 + $0x150] sm:$0xff]
    %v305 = vld [vmem:[#allocation5 + $0x158] sm:$0xff]
    %v306 = vld [vmem:[#allocation5 + $0x160] sm:$0xff]
    %v307 = vld [vmem:[#allocation5 + $0x168] sm:$0xff]
    %v308 = vld [vmem:[#allocation5 + $0x170] sm:$0xff]
    %v309 = vld [vmem:[#allocation5 + $0x178] sm:$0xff]
    %vm312 = vcmask 1041409
    %v313 = vsel %vm312, %v293, %v292
    %315 = vmatprep.subr.mxu0 0.0
    %316 = vmatpush1.msra.mxu0 %v294
    %317 = vmatprep.subr.mxu0 0.0
    %318 = vmatpush1.msra.mxu0 %v295
    %319 = vmatprep.subr.mxu0 0.0
    %320 = vmatpush1.msra.mxu0 %v296
    %321 = vmatprep.subr.mxu0 0.0
    %322 = vmatpush1.msra.mxu0 %v297
    %323 = vmatprep.subr.mxu0 0.0
    %324 = vmatpush1.msra.mxu0 %v298
    %325 = vmatprep.subr.mxu0 0.0
    %326 = vmatpush1.msra.mxu0 %v299
    %327 = vmatprep.subr.mxu0 0.0
    %328 = vmatpush1.msra.mxu0 %v300
    %329 = vmatprep.subr.mxu0 0.0
    %330 = vmatpush1.msra.mxu0 %v301
    %331 = vmatprep.subr.mxu0 0.0
    %332 = vmatpush1.msra.mxu0 %v302
    %333 = vmatprep.subr.mxu0 0.0
    %334 = vmatpush1.msra.mxu0 %v303
    %335 = vmatprep.subr.mxu0 0.0
    %336 = vmatpush1.msra.mxu0 %v304
    %337 = vmatprep.subr.mxu0 0.0
    %338 = vmatpush1.msra.mxu0 %v305
    %339 = vmatprep.subr.mxu0 0.0
    %340 = vmatpush1.msra.mxu0 %v306
    %341 = vmatprep.subr.mxu0 0.0
    %342 = vmatpush1.msra.mxu0 %v307
    %343 = vmatprep.subr.mxu0 0.0
    %344 = vmatpush1.msra.mxu0 %v308
    %345 = vmatprep.subr.mxu0 0.0
    %346 = vmatpush1.msra.mxu0 %v309
    %347 = vmatprep.subr.mxu0 0.0
    %348 = vmatpush1.msra.mxu0 0.0
    %349 = vmatprep.subr.mxu0 0.0
    %350 = vmatpush1.msra.mxu0 0.0
    %351 = vmatprep.subr.mxu0 0.0
    %352 = vmatpush1.msra.mxu0 0.0
    %353 = vmatprep.subr.mxu0 0.0
    %354 = vmatpush1.msra.mxu0 0.0
    %355 = vmatprep.subr.mxu0 0.0
    %356 = vmatpush1.msra.mxu0 0.0
    %357 = vmatprep.subr.mxu0 0.0
    %358 = vmatpush1.msra.mxu0 0.0
    %359 = vmatprep.subr.mxu0 0.0
    %360 = vmatpush1.msra.mxu0 0.0
    %361 = vmatprep.subr.mxu0 0.0
    %362 = vmatpush1.msra.mxu0 0.0
    %363 = vmatprep.subr.mxu0 0.0
    %364 = vmatpush1.msra.mxu0 0.0
    %365 = vmatprep.subr.mxu0 0.0
    %366 = vmatpush1.msra.mxu0 0.0
    %367 = vmatprep.subr.mxu0 0.0
    %368 = vmatpush1.msra.mxu0 0.0
    %369 = vmatprep.subr.mxu0 0.0
    %370 = vmatpush1.msra.mxu0 0.0
    %371 = vmatprep.subr.mxu0 0.0
    %372 = vmatpush1.msra.mxu0 0.0
    %373 = vmatprep.subr.mxu0 0.0
    %374 = vmatpush1.msra.mxu0 0.0
    %375 = vmatprep.subr.mxu0 0.0
    %376 = vmatpush1.msra.mxu0 0.0
    %377 = vmatprep.subr.mxu0 0.0
    %378 = vmatpush1.msra.mxu0 0.0
    %379 = vmatprep.mubr.f32.mxu0 0.0
    %380 = vmatmul.mubr.f32.gmra.mrb[0].mxu0 %v313
    %v381 = vpop.f32.mrb[0].mxu0
    %v382 = vadd.f32 0.0, %v381
    %v383 = vpop.f32.mrb[0].mxu0
    %384 = vdwg.mxu0
    %385 = vst [vmem:[#allocation7] sm:$0x3] %v382
    // Predicated region
    $region22: #{tpu_custom_call.1} parent=1 // pred_check
      _
    $region23: #{tpu_custom_call.1} parent=1 // pred_check_branch
      %387 = sbr.rel (0) target = $region25
    $region24: #{tpu_custom_call.1} parent=1 // pred_region
      %s389 = ssub.s32 32, 32
      %390 = vsyncadd [#allocation4], %s389
      %s392 = sshll.u32 [#allocation7], 4
      %s393 = int_to_ptr.vmem [resolvable:$true] %s392
      %395 = dma.vmem_to_hbm [thread:$0]  %s393, 32, %s3, [#allocation4]
    $region25: #{tpu_custom_call.1} parent=1 // pred_fallthru
      _
    // Predicated region
    $region26: #{tpu_custom_call.1} parent=1 // pred_check
      _
    $region27: #{tpu_custom_call.1} parent=1 // pred_check_branch
      %397 = sbr.rel (0) target = $region29
    $region28: #{tpu_custom_call.1} parent=1 // pred_region
      %398 = dma.done [#allocation4], 32
    $region29: #{tpu_custom_call.1} parent=1 // pred_fallthru
      _
    %399 = vsyncpa [#allocation3], 1
    %400 = vsyncpa [#allocation6], 1
    %401 = vsyncpa [#allocation4], 1

</llo_original>
